<compile_context>
chip_gen: v7x
topology: tpu7x:2x2x1
jax: 0.10.0
libtpu: 0.0.40
codegen_flags: <defaults>
</compile_context>

<pallas_src>
import jax
import jax.numpy as jnp
from jax import lax
from jax.experimental import pallas as pl
from jax.experimental.pallas import tpu as pltpu

EPS = 1e-5  # nn.LayerNorm default

# Budget used for tile sizing; stays under default scoped VMEM on all gens
# (16 MiB v5e is the only one we may exceed, hence vmem_limit_bytes below).
_VMEM_TILE_BUDGET = 28 * 2**20


def _postnorm_kernel(x_ref, w_ref, b_ref, g_ref, bt_ref, o_ref, acc_ref):
    # x_ref:   (TM, TK)  row tile of the flattened input, native dtype
    # w_ref:   (D, TK)   Linear weight slab, PyTorch (out_features, in_features) layout
    # b_ref:   (1, D)    Linear bias
    # g_ref:   (1, D)    LayerNorm weight (gamma)
    # bt_ref:  (1, D)    LayerNorm bias (beta)
    # o_ref:   (TM, D)   output row tile
    # acc_ref: (TM, D)   f32 matmul accumulator (VMEM scratch)
    k = pl.program_id(1)

    @pl.when(k == 0)
    def _():
        acc_ref[...] = jnp.zeros_like(acc_ref)

    # x @ W.T : contract x axis 1 with w axis 1; MXU with f32 accumulation.
    acc_ref[...] += lax.dot_general(
        x_ref[...], w_ref[...],
        dimension_numbers=(((1,), (1,)), ((), ())),
        preferred_element_type=jnp.float32)

    @pl.when(k == pl.num_programs(1) - 1)
    def _():
        y = acc_ref[...] + b_ref[...].astype(jnp.float32)
        inv_d = 1.0 / y.shape[-1]
        # Single-pass statistics: one sweep produces sum and sum of squares.
        sum_y = jnp.sum(y, axis=-1, keepdims=True)
        sum_y2 = jnp.sum(y * y, axis=-1, keepdims=True)
        mean = sum_y * inv_d
        var = jnp.maximum(sum_y2 * inv_d - mean * mean, 0.0)
        inv = lax.rsqrt(var + EPS)
        scale = inv * g_ref[...].astype(jnp.float32)      # fold gamma into the scale
        out = (y - mean) * scale + bt_ref[...].astype(jnp.float32)
        o_ref[...] = out.astype(o_ref.dtype)


def _largest_divisor_tile(n, target, quantum):
    """Largest t <= target with n % t == 0 and t % quantum == 0, else n."""
    target = min(target, n)
    if target >= n:
        return n
    t = (target // quantum) * quantum
    while t >= quantum:
        if n % t == 0:
            return t
        t -= quantum
    return n


def postnorm(x, w, b, gamma, beta, *, tile_rows=256):
    """PostNorm(dim, Linear(dim, dim)) forward.

    x: [B, S, D]; w: [D, D] (out_features, in_features, PyTorch layout —
    NOT pre-transposed); b, gamma, beta: [D]."""
    B, S, D = x.shape
    rows = B * S
    x2 = x.reshape(rows, D)
    b2 = b.reshape(1, D)
    g2 = gamma.reshape(1, D)
    be2 = beta.reshape(1, D)

    x_bytes = jnp.dtype(x.dtype).itemsize
    w_bytes = jnp.dtype(w.dtype).itemsize
    o_bytes = x_bytes

    # --- K tile: keep the (D, tk) weight slab (double-buffered) within half
    # the budget; tk = D (fully resident weight) whenever it fits.
    tk_cap = max(128, (_VMEM_TILE_BUDGET // 2) // max(1, 2 * D * w_bytes))
    tk = _largest_divisor_tile(D, tk_cap, 128)

    # --- Row tile: VMEM-budgeted (double-buffered x/out tiles + f32 acc).
    remaining = max(0, _VMEM_TILE_BUDGET - 2 * D * tk * w_bytes)
    per_row = 2 * tk * x_bytes + 2 * D * o_bytes + 4 * D
    tm_cap = max(8, remaining // max(1, per_row))
    tm = _largest_divisor_tile(rows, min(tile_rows, tm_cap), 8)
    # Keep at least 2 row steps when possible so the "parallel" axis can
    # shard across the two TensorCores on v7x (and pipeline DMA everywhere).
    if rows >= 16 and rows // tm < 2:
        tm = _largest_divisor_tile(rows, rows // 2, 8)

    grid = (rows // tm, D // tk)

    est_vmem = (2 * D * tk * w_bytes              # weight slab (double-buffered)
                + 2 * tm * tk * x_bytes           # x tile
                + 2 * tm * D * o_bytes            # out tile
                + tm * D * 4                      # f32 accumulator scratch
                + 6 * D * 4)                      # bias / gamma / beta
    vmem_limit = int(min(64 * 2**20, max(32 * 2**20, int(1.5 * est_vmem))))

    cost = pl.CostEstimate(
        flops=2 * rows * D * D,
        transcendentals=rows,
        bytes_accessed=rows * D * (x_bytes + o_bytes) + D * D * w_bytes + 3 * D * 4)

    out = pl.pallas_call(
        _postnorm_kernel,
        out_shape=jax.ShapeDtypeStruct((rows, D), x.dtype),
        grid_spec=pltpu.PrefetchScalarGridSpec(
            num_scalar_prefetch=0,
            grid=grid,
            in_specs=[
                pl.BlockSpec((tm, tk), lambda i, k: (i, k)),   # x rows
                pl.BlockSpec((D, tk), lambda i, k: (0, k)),    # weight slab
                pl.BlockSpec((1, D), lambda i, k: (0, 0)),     # linear bias
                pl.BlockSpec((1, D), lambda i, k: (0, 0)),     # ln gamma
                pl.BlockSpec((1, D), lambda i, k: (0, 0)),     # ln beta
            ],
            out_specs=pl.BlockSpec((tm, D), lambda i, k: (i, 0)),
            scratch_shapes=[pltpu.VMEM((tm, D), jnp.float32)],
        ),
        compiler_params=pltpu.CompilerParams(
            dimension_semantics=("parallel", "arbitrary"),
            vmem_limit_bytes=vmem_limit),
        cost_estimate=cost,
    )(x2, w, b2, g2, be2)
    return out.reshape(B, S, D)


def postnorm_ref(x, w, b, gamma, beta):
    y = jnp.einsum("bsd,od->bso", x.astype(jnp.float32), w.astype(jnp.float32)) + b
    mean = jnp.mean(y, axis=-1, keepdims=True)
    var = jnp.mean((y - mean) ** 2, axis=-1, keepdims=True)
    yn = (y - mean) * lax.rsqrt(var + EPS)
    return (yn * gamma + beta).astype(x.dtype)


if __name__ == "__main__":
    key = jax.random.PRNGKey(0)
    kx, kw, kb = jax.random.split(key, 3)

    B, S, D = 2, 16, 128  # lane-dense feature dim; rows tile into 2 grid steps
    x = jax.random.normal(kx, (B, S, D), dtype=jnp.float32)

    # fn = nn.Linear(D, D): deterministic synthetic init (uniform, PyTorch-like bound)
    bound = 1.0 / (D ** 0.5)
    w = jax.random.uniform(kw, (D, D), minval=-bound, maxval=bound, dtype=jnp.float32)
    b = jax.random.uniform(kb, (D,), minval=-bound, maxval=bound, dtype=jnp.float32)

    # nn.LayerNorm(D) default init: weight = ones, bias = zeros
    gamma = jnp.ones((D,), dtype=jnp.float32)
    beta = jnp.zeros((D,), dtype=jnp.float32)

    out = postnorm(x, w, b, gamma, beta)
    out = jax.block_until_ready(out)

    ref = postnorm_ref(x, w, b, gamma, beta)
    assert out.shape == (B, S, D)
    assert jnp.allclose(out, ref, atol=2e-4, rtol=2e-4), "mismatch vs reference"

    print("KERNEL_OK")
</pallas_src>

<mosaic_0001>
module attributes {stable_mosaic.version = 11 : i64} {
  func.func @_postnorm_kernel(%arg0: i32, %arg1: i32, %arg2: memref<16x128xf32, #tpu.memory_space<vmem>>, %arg3: memref<128x128xf32, #tpu.memory_space<vmem>>, %arg4: memref<1x128xf32, #tpu.memory_space<vmem>>, %arg5: memref<1x128xf32, #tpu.memory_space<vmem>>, %arg6: memref<1x128xf32, #tpu.memory_space<vmem>>, %arg7: memref<16x128xf32, #tpu.memory_space<vmem>>, %arg8: memref<16x128xf32, #tpu.memory_space<vmem>>) attributes {dimension_semantics = [#tpu.dimension_semantics<parallel>, #tpu.dimension_semantics<arbitrary>], iteration_bounds = array<i64: 2, 1>, scalar_prefetch = 0 : i64, scratch_operands = 1 : i64, tpu.core_type = #tpu.core_type<tc>, window_params = [{transform_indices = @transform_0, window_bounds = array<i64: 16, 128>}, {transform_indices = @transform_1, window_bounds = array<i64: 128, 128>}, {pipeline_mode = #tpu.pipeline_mode<synchronous>, transform_indices = @transform_2, window_bounds = array<i64: 1, 128>}, {pipeline_mode = #tpu.pipeline_mode<synchronous>, transform_indices = @transform_3, window_bounds = array<i64: 1, 128>}, {pipeline_mode = #tpu.pipeline_mode<synchronous>, transform_indices = @transform_4, window_bounds = array<i64: 1, 128>}, {transform_indices = @transform_5, window_bounds = array<i64: 16, 128>}]} {
    %c0_i32 = arith.constant 0 : i32
    %0 = arith.cmpi eq, %arg1, %c0_i32 : i32
    %1 = arith.extui %0 : i1 to i32
    %c0_i32_0 = arith.constant 0 : i32
    %2 = arith.cmpi ne, %1, %c0_i32_0 : i32
    scf.if %2 {
      %cst_10 = arith.constant 0.000000e+00 : f32
      %12 = vector.broadcast %cst_10 : f32 to vector<16x128xf32>
      %c0_11 = arith.constant 0 : index
      %c0_12 = arith.constant 0 : index
      %13 = vector.load %arg8[%c0_11, %c0_12] : memref<16x128xf32, #tpu.memory_space<vmem>>, vector<16x128xf32>
      tpu.vector_store %arg8[%c0_11, %c0_12], %12 {strides = array<i32>} : memref<16x128xf32, #tpu.memory_space<vmem>>, vector<16x128xf32>,
    } else {
    }
    %c0 = arith.constant 0 : index
    %c0_1 = arith.constant 0 : index
    %3 = vector.load %arg8[%c0, %c0_1] : memref<16x128xf32, #tpu.memory_space<vmem>>, vector<16x128xf32>
    %c0_2 = arith.constant 0 : index
    %c0_3 = arith.constant 0 : index
    %4 = vector.load %arg2[%c0_2, %c0_3] : memref<16x128xf32, #tpu.memory_space<vmem>>, vector<16x128xf32>
    %c0_4 = arith.constant 0 : index
    %c0_5 = arith.constant 0 : index
    %5 = vector.load %arg3[%c0_4, %c0_5] : memref<128x128xf32, #tpu.memory_space<vmem>>, vector<128x128xf32>
    %cst = arith.constant dense<0.000000e+00> : vector<16x128xf32>
    %6 = tpu.matmul %4, %5, %cst {dimension_numbers = #tpu.dot_dimension_numbers<[1], [1], [0], [0], [0, 0, 1, 0], [], []>} : vector<16x128xf32>, vector<128x128xf32>, vector<16x128xf32> -> vector<16x128xf32>
    %7 = arith.addf %3, %6 : vector<16x128xf32>
    %c0_6 = arith.constant 0 : index
    %c0_7 = arith.constant 0 : index
    %8 = vector.load %arg8[%c0_6, %c0_7] : memref<16x128xf32, #tpu.memory_space<vmem>>, vector<16x128xf32>
    tpu.vector_store %arg8[%c0_6, %c0_7], %7 {strides = array<i32>} : memref<16x128xf32, #tpu.memory_space<vmem>>, vector<16x128xf32>,
    %c0_i32_8 = arith.constant 0 : i32
    %9 = arith.cmpi eq, %arg1, %c0_i32_8 : i32
    %10 = arith.extui %9 : i1 to i32
    %c0_i32_9 = arith.constant 0 : i32
    %11 = arith.cmpi ne, %10, %c0_i32_9 : i32
    scf.if %11 {
      %c0_10 = arith.constant 0 : index
      %c0_11 = arith.constant 0 : index
      %12 = vector.load %arg8[%c0_10, %c0_11] : memref<16x128xf32, #tpu.memory_space<vmem>>, vector<16x128xf32>
      %c0_12 = arith.constant 0 : index
      %c0_13 = arith.constant 0 : index
      %13 = vector.load %arg4[%c0_12, %c0_13] : memref<1x128xf32, #tpu.memory_space<vmem>>, vector<1x128xf32>
      %14 = vector.broadcast %13 : vector<1x128xf32> to vector<16x128xf32>
      %15 = arith.addf %12, %14 : vector<16x128xf32>
      %cst_14 = arith.constant dense<0.000000e+00> : vector<16xf32>
      %16 = vector.multi_reduction <add>, %15, %cst_14 [1] : vector<16x128xf32> to vector<16xf32>
      %17 = vector.shape_cast %16 : vector<16xf32> to vector<16x1xf32>
      %18 = arith.mulf %15, %15 : vector<16x128xf32>
      %cst_15 = arith.constant dense<0.000000e+00> : vector<16xf32>
      %19 = vector.multi_reduction <add>, %18, %cst_15 [1] : vector<16x128xf32> to vector<16xf32>
      %20 = vector.shape_cast %19 : vector<16xf32> to vector<16x1xf32>
      %cst_16 = arith.constant 7.812500e-03 : f32
      %21 = vector.broadcast %cst_16 : f32 to vector<16x1xf32>
      %22 = arith.mulf %17, %21 : vector<16x1xf32>
      %cst_17 = arith.constant 7.812500e-03 : f32
      %23 = vector.broadcast %cst_17 : f32 to vector<16x1xf32>
      %24 = arith.mulf %20, %23 : vector<16x1xf32>
      %25 = arith.mulf %22, %22 : vector<16x1xf32>
      %26 = arith.subf %24, %25 : vector<16x1xf32>
      %cst_18 = arith.constant 0.000000e+00 : f32
      %27 = vector.broadcast %cst_18 : f32 to vector<16x1xf32>
      %28 = arith.maximumf %26, %27 : vector<16x1xf32>
      %cst_19 = arith.constant 9.99999974E-6 : f32
      %29 = vector.broadcast %cst_19 : f32 to vector<16x1xf32>
      %30 = arith.addf %28, %29 : vector<16x1xf32>
      %31 = math.rsqrt %30 : vector<16x1xf32>
      %c0_20 = arith.constant 0 : index
      %c0_21 = arith.constant 0 : index
      %32 = vector.load %arg5[%c0_20, %c0_21] : memref<1x128xf32, #tpu.memory_space<vmem>>, vector<1x128xf32>
      %33 = vector.broadcast %31 : vector<16x1xf32> to vector<16x128xf32>
      %34 = vector.broadcast %32 : vector<1x128xf32> to vector<16x128xf32>
      %35 = arith.mulf %33, %34 : vector<16x128xf32>
      %36 = vector.broadcast %22 : vector<16x1xf32> to vector<16x128xf32>
      %37 = arith.subf %15, %36 : vector<16x128xf32>
      %38 = arith.mulf %37, %35 : vector<16x128xf32>
      %c0_22 = arith.constant 0 : index
      %c0_23 = arith.constant 0 : index
      %39 = vector.load %arg6[%c0_22, %c0_23] : memref<1x128xf32, #tpu.memory_space<vmem>>, vector<1x128xf32>
      %40 = vector.broadcast %39 : vector<1x128xf32> to vector<16x128xf32>
      %41 = arith.addf %38, %40 : vector<16x128xf32>
      %c0_24 = arith.constant 0 : index
      %c0_25 = arith.constant 0 : index
      %42 = vector.load %arg7[%c0_24, %c0_25] : memref<16x128xf32, #tpu.memory_space<vmem>>, vector<16x128xf32>
      tpu.vector_store %arg7[%c0_24, %c0_25], %41 {strides = array<i32>} : memref<16x128xf32, #tpu.memory_space<vmem>>, vector<16x128xf32>,
    } else {
    }
    return
  }
  func.func @transform_0(%arg0: i32, %arg1: i32) -> (i32, i32) {
    %c0_i32 = arith.constant 0 : i32
    return %arg0, %arg1 : i32, i32
  }
  func.func @transform_1(%arg0: i32, %arg1: i32) -> (i32, i32) {
    %c0_i32 = arith.constant 0 : i32
    %c0_i32_0 = arith.constant 0 : i32
    return %c0_i32, %arg1 : i32, i32
  }
  func.func @transform_2(%arg0: i32, %arg1: i32) -> (i32, i32) {
    %c0_i32 = arith.constant 0 : i32
    %c0_i32_0 = arith.constant 0 : i32
    %c0_i32_1 = arith.constant 0 : i32
    return %c0_i32, %c0_i32_0 : i32, i32
  }
  func.func @transform_3(%arg0: i32, %arg1: i32) -> (i32, i32) {
    %c0_i32 = arith.constant 0 : i32
    %c0_i32_0 = arith.constant 0 : i32
    %c0_i32_1 = arith.constant 0 : i32
    return %c0_i32, %c0_i32_0 : i32, i32
  }
  func.func @transform_4(%arg0: i32, %arg1: i32) -> (i32, i32) {
    %c0_i32 = arith.constant 0 : i32
    %c0_i32_0 = arith.constant 0 : i32
    %c0_i32_1 = arith.constant 0 : i32
    return %c0_i32, %c0_i32_0 : i32, i32
  }
  func.func @transform_5(%arg0: i32, %arg1: i32) -> (i32, i32) {
    %c0_i32 = arith.constant 0 : i32
    %c0_i32_0 = arith.constant 0 : i32
    return %arg0, %c0_i32 : i32, i32
  }
}

</mosaic_0001>

<llo_original>
// kernel: tpu_custom_call.1
$region0: #{tpu_custom_call.1}
  #allocation0 [shape = 'u32[]', space=smem, size = 0x4, offset = 0x4, fixed_abs, tag = 'smem constant byte address 0x4 - core index']
  #allocation1 [shape = 'u32[144,128]{1,0:T(1,128)}', space=vmem, size = 0x12000, scoped, tag = 'internal scratch']
  #allocation2 [shape = 'f32[16,128]{1,0:T(8,128)}', space=vmem, size = 0x2000, scoped, tag = 'scratch operand']
  %s0 = inlined_call_operand.hbm [shape: f32[32,128], index: 0, kind: input, shape index: {}]
  %s1 = inlined_call_operand.hbm [shape: f32[128,128], index: 1, kind: input, shape index: {}]
  %s2 = inlined_call_operand.vmem [shape: f32[1,128], index: 2, kind: input, shape index: {}]
  %s3 = inlined_call_operand.vmem [shape: f32[1,128], index: 3, kind: input, shape index: {}]
  %s4 = inlined_call_operand.vmem [shape: f32[1,128], index: 4, kind: input, shape index: {}]
  %s5 = inlined_call_operand.hbm [shape: f32[32,128], index: 5, kind: output, shape index: {}]
  %s6 = sld [smem:[#allocation0]]
  $region69: #{tpu_custom_call.1} parent=0
    _
  %s8 = ssub.s32 1, %s6
  %s9 = scalar_select 0, %s8, %s6
  $region1: #{tpu_custom_call.1} parent=0
    #allocation3 [shape = 'u8[16384]{0}', space=vmem, size = 0x4000, scoped, tag = 'input window, operand 0']
    #allocation4 [shape = 's32[2]{0}', space=sflag, size = 0x8, scoped, tag = 'scoped memory for tpu_custom_call.1']
    #allocation5 [shape = 's32[2]{0}', space=sflag, size = 0x8, scoped, tag = 'scoped memory for tpu_custom_call.1']
    #allocation6 [shape = 'u8[65536]{0}', space=vmem, size = 0x10000, scoped, tag = 'input window, operand 1, single buffered']
    #allocation7 [shape = 's32[1]{0}', space=sflag, size = 0x4, scoped, tag = 'scoped memory for tpu_custom_call.1']
    #allocation8 [shape = 'u8[16384]{0}', space=vmem, size = 0x4000, scoped, tag = 'output window, operand 0']
    %10 = vsyncpa [#allocation4], 0
    %s11 = scalar_lea.sflag [#allocation4], 1
    %12 = vsyncpa %s11, 0
    %13 = vsyncpa [#allocation7], 0
    %14 = vsyncpa [#allocation5], 0
    %s15 = scalar_lea.sflag [#allocation5], 1
    %16 = vsyncpa %s15, 0
    loop: start=0, step=1, limit=4
    $region2: #{tpu_custom_call.1} parent=1 // loop_pre_header
      _
    $region3: #{tpu_custom_call.1} parent=1 // loop_header
      %s18 = sphi 0, %s22
      %p19 = scmp.ge.s32.totalorder %s18, 4
      %s25 = sphi 0, %s37
      %s26 = sphi 0, %s33
      %s27 = sphi 0, %s25
      %s28 = sphi 0, %s26
      %s29 = sphi 0, %s27
      %s30 = sphi 0, %s28
      %s42 = sphi 0, %s44
      %s45 = sphi 0, %s42
      %s46 = sphi 0, %s45
      %s62 = sphi 0, %s46
      %s68 = sphi 0, %s70
      %s71 = sphi 0, %s68
      %s72 = sphi 0, %s71
      %s88 = sphi 0, %s72
      %s92 = sphi 0, %s92
      %s94 = sphi 0, %s92
      %s95 = sphi 0, %s94
      %s109 = sphi 0, %s95
      %s113 = sphi 0, %s113
      %s115 = sphi 0, %s113
      %s116 = sphi 0, %s115
      %s130 = sphi 0, %s116
      %s134 = sphi 0, %s134
      %s136 = sphi 0, %s134
      %s137 = sphi 0, %s136
      %s151 = sphi 0, %s137
      %s157 = sphi 0, %s159
      %s160 = sphi 0, %s157
      %s161 = sphi 0, %s160
      %s177 = sphi 0, %s161
    $region4: #{tpu_custom_call.1} parent=1 // loop_header_branch
      %21 = sbr.rel (%p19) target = $region8
    $region5: #{tpu_custom_call.1} parent=1 // loop_body
      %s23 = ssub.s32 %s18, 1
      %s24 = ssub.s32 %s18, 2
      %s31 = sadd.s32 1, %s26
      %p32 = scmp.ge.s32.totalorder %s31, 1
      %s33 = scalar_select %p32, 0, %s31
      %s34 = sadd.s32 1, %s25
      %s35 = scalar_select %p32, %s34, %s25
      %p36 = scmp.ge.s32.totalorder %s35, 2
      %s37 = scalar_select %p36, 0, %s35
      %s38 = ssub.s32 %s25, %s37
      %s39 = ssub.s32 %s26, %s33
      %s40 = sor.u32 %s38, %s39
      %p41 = scmp.eq.s32.totalorder %s40, 0
      %s43 = sadd.s32 %s42, 1
      %s44 = scalar_select %p41, %s42, %s43
      %p47 = pneg %p41
      %p48 = scmp.eq.s32.totalorder %s18, 1
      %p49 = por %p47, %p48
      %p50 = scmp.ne.s32.totalorder %s42, %s45
      %p51 = scmp.eq.s32.totalorder %s18, 0
      %p52 = por %p50, %p51
      %p53 = scmp.ne.s32.totalorder %s42, %s45
      %p54 = scmp.eq.s32.totalorder %s23, 1
      %p55 = por %p53, %p54
      %p56 = scmp.ne.s32.totalorder %s45, %s46
      %p57 = scmp.eq.s32.totalorder %s23, 0
      %p58 = por %p56, %p57
      %p59 = scmp.ne.s32.totalorder %s45, %s46
      %p60 = scmp.eq.s32.totalorder %s24, 1
      %p61 = por %p59, %p60
      %p63 = scmp.ne.s32.totalorder %s46, %s62
      %p64 = scmp.eq.s32.totalorder %s24, 0
      %p65 = por %p63, %p64
      %s66 = ssub.s32 %s26, %s33
      %p67 = scmp.eq.s32.totalorder %s66, 0
      %s69 = sadd.s32 %s68, 1
      %s70 = scalar_select %p67, %s68, %s69
      %p73 = pneg %p67
      %p74 = scmp.eq.s32.totalorder %s18, 1
      %p75 = por %p73, %p74
      %p76 = scmp.ne.s32.totalorder %s68, %s71
      %p77 = scmp.eq.s32.totalorder %s18, 0
      %p78 = por %p76, %p77
      %p79 = scmp.ne.s32.totalorder %s68, %s71
      %p80 = scmp.eq.s32.totalorder %s23, 1
      %p81 = por %p79, %p80
      %p82 = scmp.ne.s32.totalorder %s71, %s72
      %p83 = scmp.eq.s32.totalorder %s23, 0
      %p84 = por %p82, %p83
      %p85 = scmp.ne.s32.totalorder %s71, %s72
      %p86 = scmp.eq.s32.totalorder %s24, 1
      %p87 = por %p85, %p86
      %p89 = scmp.ne.s32.totalorder %s72, %s88
      %p90 = scmp.eq.s32.totalorder %s24, 0
      %p91 = por %p89, %p90
      %s93 = sadd.s32 %s92, 1
      %p96 = scmp.eq.s32.totalorder %s18, 1
      %p97 = scmp.ne.s32.totalorder %s92, %s94
      %p98 = scmp.eq.s32.totalorder %s18, 0
      %p99 = por %p97, %p98
      %p100 = scmp.ne.s32.totalorder %s92, %s94
      %p101 = scmp.eq.s32.totalorder %s23, 1
      %p102 = por %p100, %p101
      %p103 = scmp.ne.s32.totalorder %s94, %s95
      %p104 = scmp.eq.s32.totalorder %s23, 0
      %p105 = por %p103, %p104
      %p106 = scmp.ne.s32.totalorder %s94, %s95
      %p107 = scmp.eq.s32.totalorder %s24, 1
      %p108 = por %p106, %p107
      %p110 = scmp.ne.s32.totalorder %s95, %s109
      %p111 = scmp.eq.s32.totalorder %s24, 0
      %p112 = por %p110, %p111
      %s114 = sadd.s32 %s113, 1
      %p117 = scmp.eq.s32.totalorder %s18, 1
      %p118 = scmp.ne.s32.totalorder %s113, %s115
      %p119 = scmp.eq.s32.totalorder %s18, 0
      %p120 = por %p118, %p119
      %p121 = scmp.ne.s32.totalorder %s113, %s115
      %p122 = scmp.eq.s32.totalorder %s23, 1
      %p123 = por %p121, %p122
      %p124 = scmp.ne.s32.totalorder %s115, %s116
      %p125 = scmp.eq.s32.totalorder %s23, 0
      %p126 = por %p124, %p125
      %p127 = scmp.ne.s32.totalorder %s115, %s116
      %p128 = scmp.eq.s32.totalorder %s24, 1
      %p129 = por %p127, %p128
      %p131 = scmp.ne.s32.totalorder %s116, %s130
      %p132 = scmp.eq.s32.totalorder %s24, 0
      %p133 = por %p131, %p132
      %s135 = sadd.s32 %s134, 1
      %p138 = scmp.eq.s32.totalorder %s18, 1
      %p139 = scmp.ne.s32.totalorder %s134, %s136
      %p140 = scmp.eq.s32.totalorder %s18, 0
      %p141 = por %p139, %p140
      %p142 = scmp.ne.s32.totalorder %s134, %s136
      %p143 = scmp.eq.s32.totalorder %s23, 1
      %p144 = por %p142, %p143
      %p145 = scmp.ne.s32.totalorder %s136, %s137
      %p146 = scmp.eq.s32.totalorder %s23, 0
      %p147 = por %p145, %p146
      %p148 = scmp.ne.s32.totalorder %s136, %s137
      %p149 = scmp.eq.s32.totalorder %s24, 1
      %p150 = por %p148, %p149
      %p152 = scmp.ne.s32.totalorder %s137, %s151
      %p153 = scmp.eq.s32.totalorder %s24, 0
      %p154 = por %p152, %p153
      %s155 = ssub.s32 %s25, %s37
      %p156 = scmp.eq.s32.totalorder %s155, 0
      %s158 = sadd.s32 %s157, 1
      %s159 = scalar_select %p156, %s157, %s158
      %p162 = pneg %p156
      %p163 = scmp.eq.s32.totalorder %s18, 1
      %p164 = por %p162, %p163
      %p165 = scmp.ne.s32.totalorder %s157, %s160
      %p166 = scmp.eq.s32.totalorder %s18, 0
      %p167 = por %p165, %p166
      %p168 = scmp.ne.s32.totalorder %s157, %s160
      %p169 = scmp.eq.s32.totalorder %s23, 1
      %p170 = por %p168, %p169
      %p171 = scmp.ne.s32.totalorder %s160, %s161
      %p172 = scmp.eq.s32.totalorder %s23, 0
      %p173 = por %p171, %p172
      %p174 = scmp.ne.s32.totalorder %s160, %s161
      %p175 = scmp.eq.s32.totalorder %s24, 1
      %p176 = por %p174, %p175
      %p178 = scmp.ne.s32.totalorder %s161, %s177
      %p179 = scmp.eq.s32.totalorder %s24, 0
      %p180 = por %p178, %p179
      %p181 = scmp.le.s32.totalorder 1, %s18
      %p182 = scmp.lt.s32.totalorder %s18, 3
      %p183 = pnand %p181, %p182
      %p184 = pneg %p183
      // Predicated region
      $region9: #{tpu_custom_call.1} parent=5 // pred_check
        _
      $region10: #{tpu_custom_call.1} parent=5 // pred_check_branch
        %186 = sbr.rel (%p183) target = $region12
      $region11: #{tpu_custom_call.1} parent=5 // pred_region
        %s187 = ssub.s32 %s18, 1
        // Predicated region
        $region13: #{tpu_custom_call.1} parent=11 // pred_check
          %p188 = pneg %p84
        $region14: #{tpu_custom_call.1} parent=11 // pred_check_branch
          %190 = sbr.rel (%p188) target = $region16
        $region15: #{tpu_custom_call.1} parent=11 // pred_region
          %s192 = ssub.s32 2048, 2048
          %193 = vsyncadd [#allocation7], %s192
          %s194 = smul.addr %s28, 128
          %s195 = scalar_lea.hbm %s1, %s194
          %s196 = sshll.u32 [#allocation6], 4
          %s197 = int_to_ptr.vmem [resolvable:$true] %s196
          %202 = dma.hbm_to_vmem [thread:$0]  %s195, 2048, %s197, [#allocation7], 128, 128, 8
        $region16: #{tpu_custom_call.1} parent=11 // pred_fallthru
          _
        // Predicated region
        $region17: #{tpu_custom_call.1} parent=11 // pred_check
          %p203 = pneg %p105
        $region18: #{tpu_custom_call.1} parent=11 // pred_check_branch
          %205 = sbr.rel (%p203) target = $region20
        $region19: #{tpu_custom_call.1} parent=11 // pred_region
          _
        $region20: #{tpu_custom_call.1} parent=11 // pred_fallthru
          _
        // Predicated region
        $region21: #{tpu_custom_call.1} parent=11 // pred_check
          %p206 = pneg %p126
        $region22: #{tpu_custom_call.1} parent=11 // pred_check_branch
          %208 = sbr.rel (%p206) target = $region24
        $region23: #{tpu_custom_call.1} parent=11 // pred_region
          _
        $region24: #{tpu_custom_call.1} parent=11 // pred_fallthru
          _
        // Predicated region
        $region25: #{tpu_custom_call.1} parent=11 // pred_check
          %p209 = pneg %p147
        $region26: #{tpu_custom_call.1} parent=11 // pred_check_branch
          %211 = sbr.rel (%p209) target = $region28
        $region27: #{tpu_custom_call.1} parent=11 // pred_region
          _
        $region28: #{tpu_custom_call.1} parent=11 // pred_fallthru
          _
      $region12: #{tpu_custom_call.1} parent=5 // pred_fallthru
        _
      %p212 = scmp.lt.s32.totalorder %s18, 2
      // Predicated region
      $region29: #{tpu_custom_call.1} parent=5 // pred_check
        %p213 = pneg %p212
      $region30: #{tpu_custom_call.1} parent=5 // pred_check_branch
        %215 = sbr.rel (%p213) target = $region32
      $region31: #{tpu_custom_call.1} parent=5 // pred_region
        // Predicated region
        $region33: #{tpu_custom_call.1} parent=31 // pred_check
          %p216 = pneg %p52
        $region34: #{tpu_custom_call.1} parent=31 // pred_check_branch
          %218 = sbr.rel (%p216) target = $region36
        $region35: #{tpu_custom_call.1} parent=31 // pred_region
          %s219 = sand.u32 %s42, 1
          %s220 = scalar_lea.sflag [#allocation4], %s219
          %s221 = sand.u32 %s42, 1
          %s222 = smul.addr %s221, 16
          %s223 = scalar_lea.vmem [#allocation3], %s222
          %s224 = smul.u32 2, %s25
          %s226 = ssub.s32 256, 256
          %227 = vsyncadd %s220, %s226
          %s228 = sadd.s32 %s26, %s224
          %s229 = smul.addr %s228, 128
          %s230 = scalar_lea.hbm %s0, %s229
          %s231 = sshll.u32 %s223, 4
          %s232 = int_to_ptr.vmem [resolvable:$true] %s231
          %237 = dma.hbm_to_vmem [thread:$0]  %s230, 256, %s232, %s220, 128, 128, 8
        $region36: #{tpu_custom_call.1} parent=31 // pred_fallthru
          _
      $region32: #{tpu_custom_call.1} parent=5 // pred_fallthru
        _
      %p238 = scmp.le.s32.totalorder 1, %s18
      %p239 = scmp.lt.s32.totalorder %s18, 3
      %p240 = pnand %p238, %p239
      %p241 = pneg %p240
      // Predicated region
      $region37: #{tpu_custom_call.1} parent=5 // pred_check
        _
      $region38: #{tpu_custom_call.1} parent=5 // pred_check_branch
        %243 = sbr.rel (%p240) target = $region40
      $region39: #{tpu_custom_call.1} parent=5 // pred_region
        %s244 = ssub.s32 %s18, 1
        %s245 = sand.u32 %s45, 1
        %s246 = scalar_lea.sflag [#allocation4], %s245
        %s247 = sand.u32 %s45, 1
        %s248 = smul.addr %s247, 16
        %s249 = scalar_lea.vmem [#allocation3], %s248
        // Predicated region
        $region41: #{tpu_custom_call.1} parent=39 // pred_check
          %p250 = pneg %p58
        $region42: #{tpu_custom_call.1} parent=39 // pred_check_branch
          %252 = sbr.rel (%p250) target = $region44
        $region43: #{tpu_custom_call.1} parent=39 // pred_region
          %253 = dma.done %s246, 256
        $region44: #{tpu_custom_call.1} parent=39 // pred_fallthru
          _
        // Predicated region
        $region45: #{tpu_custom_call.1} parent=39 // pred_check
          %p254 = pneg %p84
        $region46: #{tpu_custom_call.1} parent=39 // pred_check_branch
          %256 = sbr.rel (%p254) target = $region48
        $region47: #{tpu_custom_call.1} parent=39 // pred_region
          %257 = dma.done [#allocation7], 2048
        $region48: #{tpu_custom_call.1} parent=39 // pred_fallthru
          _
        %s258 = sand.u32 %s45, 1
        %s259 = scalar_lea.sflag [#allocation4], %s258
        %s260 = sand.u32 %s45, 1
        %s261 = smul.addr %s260, 16
        %s262 = scalar_lea.vmem [#allocation3], %s261
        %p263 = pneg %p58
        %p264 = pneg %p55
        %p265 = pneg %p84
        %p266 = pneg %p81
        %p267 = pneg %p105
        %p268 = pneg %p102
        %p269 = pneg %p126
        %p270 = pneg %p123
        %p271 = pneg %p147
        %p272 = pneg %p144
        %p273 = pneg %p173
        %p274 = pneg %p170
        %s275 = sand.u32 %s160, 1
        %s276 = scalar_lea.sflag [#allocation5], %s275
        %s277 = sand.u32 %s160, 1
        %s278 = smul.addr %s277, 16
        %s279 = scalar_lea.vmem [#allocation8], %s278
        %s280 = smul.u32 2, %s27
        %s281 = smul.u32 2, %s27
        %p282 = scmp.eq.s32.totalorder %s28, 0
        // Predicated region
        $region49: #{tpu_custom_call.1} parent=39 // pred_check
          %p283 = pneg %p282
        $region50: #{tpu_custom_call.1} parent=39 // pred_check_branch
          %285 = sbr.rel (%p283) target = $region52
        $region51: #{tpu_custom_call.1} parent=39 // pred_region
          %286 = vst [vmem:[#allocation2] sm:$0xff] 0.0
          %287 = vst [vmem:[#allocation2 + $0x8] sm:$0xff] 0.0
        $region52: #{tpu_custom_call.1} parent=39 // pred_fallthru
          _
        %v288 = vld [vmem:[#allocation2] sm:$0xff]
        %v289 = vld [vmem:[#allocation2 + $0x8] sm:$0xff]
        %v290 = vld [vmem:[%s249] sm:$0xff]
        %v291 = vld [vmem:[%s249 + $0x8] sm:$0xff]
        %v292 = vld [vmem:[#allocation6] sm:$0xff]
        %v293 = vld [vmem:[#allocation6 + $0x8] sm:$0xff]
        %v294 = vld [vmem:[#allocation6 + $0x10] sm:$0xff]
        %v295 = vld [vmem:[#allocation6 + $0x18] sm:$0xff]
        %v296 = vld [vmem:[#allocation6 + $0x20] sm:$0xff]
        %v297 = vld [vmem:[#allocation6 + $0x28] sm:$0xff]
        %v298 = vld [vmem:[#allocation6 + $0x30] sm:$0xff]
        %v299 = vld [vmem:[#allocation6 + $0x38] sm:$0xff]
        %v300 = vld [vmem:[#allocation6 + $0x40] sm:$0xff]
        %v301 = vld [vmem:[#allocation6 + $0x48] sm:$0xff]
        %v302 = vld [vmem:[#allocation6 + $0x50] sm:$0xff]
        %v303 = vld [vmem:[#allocation6 + $0x58] sm:$0xff]
        %v304 = vld [vmem:[#allocation6 + $0x60] sm:$0xff]
        %v305 = vld [vmem:[#allocation6 + $0x68] sm:$0xff]
        %v306 = vld [vmem:[#allocation6 + $0x70] sm:$0xff]
        %v307 = vld [vmem:[#allocation6 + $0x78] sm:$0xff]
        %308 = vmatprep.subr.mxu0 0.0
        %309 = vmatpush1.xpose.msra.mxu0 %v292
        %310 = vmatprep.subr.mxu0 0.0
        %311 = vmatpush1.xpose.msra.mxu0 %v293
        %312 = vmatprep.subr.mxu0 0.0
        %313 = vmatpush1.xpose.msra.mxu0 %v294
        %314 = vmatprep.subr.mxu0 0.0
        %315 = vmatpush1.xpose.msra.mxu0 %v295
        %316 = vmatprep.subr.mxu0 0.0
        %317 = vmatpush1.xpose.msra.mxu0 %v296
        %318 = vmatprep.subr.mxu0 0.0
        %319 = vmatpush1.xpose.msra.mxu0 %v297
        %320 = vmatprep.subr.mxu0 0.0
        %321 = vmatpush1.xpose.msra.mxu0 %v298
        %322 = vmatprep.subr.mxu0 0.0
        %323 = vmatpush1.xpose.msra.mxu0 %v299
        %324 = vmatprep.subr.mxu0 0.0
        %325 = vmatpush1.xpose.msra.mxu0 %v300
        %326 = vmatprep.subr.mxu0 0.0
        %327 = vmatpush1.xpose.msra.mxu0 %v301
        %328 = vmatprep.subr.mxu0 0.0
        %329 = vmatpush1.xpose.msra.mxu0 %v302
        %330 = vmatprep.subr.mxu0 0.0
        %331 = vmatpush1.xpose.msra.mxu0 %v303
        %332 = vmatprep.subr.mxu0 0.0
        %333 = vmatpush1.xpose.msra.mxu0 %v304
        %334 = vmatprep.subr.mxu0 0.0
        %335 = vmatpush1.xpose.msra.mxu0 %v305
        %336 = vmatprep.subr.mxu0 0.0
        %337 = vmatpush1.xpose.msra.mxu0 %v306
        %338 = vmatprep.subr.mxu0 0.0
        %339 = vmatpush1.xpose.msra.mxu0 %v307
        %340 = vmatprep.subr.mxu0 0.0
        %341 = vmatpush1.xpose.msra.mxu0 0.0
        %342 = vmatprep.subr.mxu0 0.0
        %343 = vmatpush1.xpose.msra.mxu0 0.0
        %344 = vmatprep.subr.mxu0 0.0
        %345 = vmatpush1.xpose.msra.mxu0 0.0
        %346 = vmatprep.subr.mxu0 0.0
        %347 = vmatpush1.xpose.msra.mxu0 0.0
        %348 = vmatprep.subr.mxu0 0.0
        %349 = vmatpush1.xpose.msra.mxu0 0.0
        %350 = vmatprep.subr.mxu0 0.0
        %351 = vmatpush1.xpose.msra.mxu0 0.0
        %352 = vmatprep.subr.mxu0 0.0
        %353 = vmatpush1.xpose.msra.mxu0 0.0
        %354 = vmatprep.subr.mxu0 0.0
        %355 = vmatpush1.xpose.msra.mxu0 0.0
        %356 = vmatprep.subr.mxu0 0.0
        %357 = vmatpush1.xpose.msra.mxu0 0.0
        %358 = vmatprep.subr.mxu0 0.0
        %359 = vmatpush1.xpose.msra.mxu0 0.0
        %360 = vmatprep.subr.mxu0 0.0
        %361 = vmatpush1.xpose.msra.mxu0 0.0
        %362 = vmatprep.subr.mxu0 0.0
        %363 = vmatpush1.xpose.msra.mxu0 0.0
        %364 = vmatprep.subr.mxu0 0.0
        %365 = vmatpush1.xpose.msra.mxu0 0.0
        %366 = vmatprep.subr.mxu0 0.0
        %367 = vmatpush1.xpose.msra.mxu0 0.0
        %368 = vmatprep.subr.mxu0 0.0
        %369 = vmatpush1.xpose.msra.mxu0 0.0
        %370 = vmatprep.subr.mxu0 0.0
        %371 = vmatpush1.xpose.msra.mxu0 0.0
        %372 = vmatprep.mubr.f32.mxu0 0.0
        %373 = vmatmul.mubr.f32.gmra.mrb[0].mxu0 %v290
        %v374 = vpop.f32.mrb[0].mxu0
        %v375 = vadd.f32 0.0, %v374
        %v376 = vpop.f32.mrb[0].mxu0
        %377 = vmatprep.mubr.f32.mxu0 0.0
        %378 = vmatmul.mubr.f32.gmra.mrb[0].mxu0 %v291
        %v379 = vpop.f32.mrb[0].mxu0
        %v380 = vadd.f32 0.0, %v379
        %v381 = vpop.f32.mrb[0].mxu0
        %382 = vdwg.mxu0
        %v383 = vadd.f32 %v288, %v375
        %v384 = vadd.f32 %v289, %v380
        %385 = vst [vmem:[#allocation2] sm:$0xff] %v383
        %386 = vst [vmem:[#allocation2 + $0x8] sm:$0xff] %v384
        // Predicated region
        $region53: #{tpu_custom_call.1} parent=39 // pred_check
          %p387 = pneg %p282
        $region54: #{tpu_custom_call.1} parent=39 // pred_check_branch
          %389 = sbr.rel (%p387) target = $region56
        $region55: #{tpu_custom_call.1} parent=39 // pred_region
          %v390 = vld [vmem:[#allocation2] sm:$0xff]
          %v391 = vld [vmem:[#allocation2 + $0x8] sm:$0xff]
          %v392 = vld [vmem:[%s2] sm:$0x1]
          %v394 = vlaneseq
          %v395 = vshrl.u32 %v394, 7
          %v396 = vsub.s32 0, %v395
          %v397 = vrot.slane %v392, %v396
          %v399 = vadd.f32 %v390, %v397
          %v400 = vadd.f32 %v391, %v397
          %401 = vadd.xlane.f32.xlu0 %v399
          %v402 = vpop.xlane.xlu0 %401
          %403 = vadd.xlane.f32.xlu0 %v400
          %v404 = vpop.xlane.xlu0 %403
          %v405 = vmul.f32 %v399, %v399
          %v406 = vmul.f32 %v400, %v400
          %407 = vadd.xlane.f32.xlu0 %v405
          %v408 = vpop.xlane.xlu0 %407
          %409 = vadd.xlane.f32.xlu0 %v406
          %v410 = vpop.xlane.xlu0 %409
          %v411 = vmul.f32 %v402, 0.0078125
          %v412 = vmul.f32 %v404, 0.0078125
          %v413 = vmul.f32 %v408, 0.0078125
          %v414 = vmul.f32 %v410, 0.0078125
          %v415 = vmul.f32 %v411, %v411
          %v416 = vmul.f32 %v412, %v412
          %v417 = vsub.f32 %v413, %v415
          %v418 = vsub.f32 %v414, %v416
          %v419 = vmax.f32 %v417, 0.0
          %v420 = vmax.f32 %v418, 0.0
          %v421 = vadd.f32 %v419, 1e-05
          %v422 = vadd.f32 %v420, 1e-05
          %v423 = vrsqrt.pop %v421
          %v424 = vrsqrt.pop %v422
          %v425 = vld [vmem:[%s3] sm:$0x1]
          %v427 = vlaneseq
          %v428 = vshrl.u32 %v427, 7
          %v429 = vsub.s32 0, %v428
          %v430 = vrot.slane %v425, %v429
          %v432 = vmul.f32 %v423, %v430
          %v433 = vmul.f32 %v424, %v430
          %v434 = vsub.f32 %v399, %v411
          %v435 = vsub.f32 %v400, %v412
          %v436 = vmul.f32 %v434, %v432
          %v437 = vmul.f32 %v435, %v433
          %v438 = vld [vmem:[%s4] sm:$0x1]
          %v440 = vlaneseq
          %v441 = vshrl.u32 %v440, 7
          %v442 = vsub.s32 0, %v441
          %v443 = vrot.slane %v438, %v442
          %v445 = vadd.f32 %v436, %v443
          %v446 = vadd.f32 %v437, %v443
          %447 = vst [vmem:[%s279] sm:$0xff] %v445
          %448 = vst [vmem:[%s279 + $0x8] sm:$0xff] %v446
        $region56: #{tpu_custom_call.1} parent=39 // pred_fallthru
          _
        %s449 = sand.u32 %s160, 1
        %s450 = scalar_lea.sflag [#allocation5], %s449
        %s451 = sand.u32 %s160, 1
        %s452 = smul.addr %s451, 16
        %s453 = scalar_lea.vmem [#allocation8], %s452
        // Predicated region
        $region57: #{tpu_custom_call.1} parent=39 // pred_check
          %p454 = pneg %p170
        $region58: #{tpu_custom_call.1} parent=39 // pred_check_branch
          %456 = sbr.rel (%p454) target = $region60
        $region59: #{tpu_custom_call.1} parent=39 // pred_region
          %s457 = smul.u32 2, %s27
          %s459 = ssub.s32 256, 256
          %460 = vsyncadd %s450, %s459
          %s461 = smul.addr %s457, 128
          %s462 = scalar_lea.hbm %s5, %s461
          %s463 = sshll.u32 %s453, 4
          %s464 = int_to_ptr.vmem [resolvable:$true] %s463
          %469 = dma.vmem_to_hbm [thread:$0]  %s464, 256, %s462, %s450, 128, 128, 8
        $region60: #{tpu_custom_call.1} parent=39 // pred_fallthru
          _
      $region40: #{tpu_custom_call.1} parent=5 // pred_fallthru
        _
      %p470 = scmp.le.s32.totalorder 2, %s18
      // Predicated region
      $region61: #{tpu_custom_call.1} parent=5 // pred_check
        %p471 = pneg %p470
      $region62: #{tpu_custom_call.1} parent=5 // pred_check_branch
        %473 = sbr.rel (%p471) target = $region64
      $region63: #{tpu_custom_call.1} parent=5 // pred_region
        %s474 = ssub.s32 %s18, 2
        // Predicated region
        $region65: #{tpu_custom_call.1} parent=63 // pred_check
          %p475 = pneg %p176
        $region66: #{tpu_custom_call.1} parent=63 // pred_check_branch
          %477 = sbr.rel (%p475) target = $region68
        $region67: #{tpu_custom_call.1} parent=63 // pred_region
          %s478 = sand.u32 %s161, 1
          %s479 = scalar_lea.sflag [#allocation5], %s478
          %s480 = sand.u32 %s161, 1
          %s481 = smul.addr %s480, 16
          %s482 = scalar_lea.vmem [#allocation8], %s481
          %483 = dma.done %s479, 256
        $region68: #{tpu_custom_call.1} parent=63 // pred_fallthru
          _
      $region64: #{tpu_custom_call.1} parent=5 // pred_fallthru
        _
    $region6: #{tpu_custom_call.1} parent=1 // loop_footer
      %s22 = sadd.s32 1, %s18
    $region7: #{tpu_custom_call.1} parent=1 // loop_footer_branch
      %17 = sbr.rel target = $region3
    $region8: #{tpu_custom_call.1} parent=1 // loop_exit
      _
    %484 = vsyncpa [#allocation4], 1
    %s485 = scalar_lea.sflag [#allocation4], 1
    %486 = vsyncpa %s485, 1
    %487 = vsyncpa [#allocation7], 1
    %488 = vsyncpa [#allocation5], 1
    %s489 = scalar_lea.sflag [#allocation5], 1
    %490 = vsyncpa %s489, 1

</llo_original>
